<compile_context>
chip_gen: v7x
topology: tpu7x:2x2x1
jax: 0.10.0
libtpu: 0.0.40
codegen_flags: <defaults>
</compile_context>

<pallas_src>
import functools

import jax
import jax.numpy as jnp
from jax.experimental import pallas as pl
from jax.experimental.pallas import tpu as pltpu


def _round_up(x, m):
    return (x + m - 1) // m * m


def mlp_kernel(x_ref, w1_ref, b1_ref, wh_ref, bh_ref, out_ref,
               *, move_size, win_size, use_bf16, precision):
    # --- Hidden layer: MXU matmul (f32 accumulate), VPU bias-add + ReLU. -------
    xv = x_ref[...]
    if use_bf16:
        xv = xv.astype(jnp.bfloat16)            # in-kernel cast: free VPU op
    h = jnp.dot(xv, w1_ref[...], preferred_element_type=jnp.float32,
                precision=precision)
    h = jnp.maximum(h + b1_ref[...], 0.0)

    # --- Fused head matmul: one lane-dense (TB, head_pad) result. --------------
    z = jnp.dot(h.astype(wh_ref.dtype), wh_ref[...],
                preferred_element_type=jnp.float32, precision=precision)
    z = z + bh_ref[...]

    # --- Fused per-head log-softmax over disjoint lane ranges. ------------------
    head = move_size + win_size
    col = jax.lax.broadcasted_iota(jnp.int32, z.shape, 1)
    mask_move = col < move_size
    mask_win = (col >= move_size) & (col < head)

    neg = jnp.float32(-1e30)
    m_move = jnp.max(jnp.where(mask_move, z, neg), axis=-1, keepdims=True)
    m_win = jnp.max(jnp.where(mask_win, z, neg), axis=-1, keepdims=True)

    seg_m = jnp.where(mask_move, m_move, m_win)   # per-lane segment max
    s = z - seg_m
    e = jnp.exp(s)                                 # single EUP pass over the row
    d_move = jnp.sum(jnp.where(mask_move, e, 0.0), axis=-1, keepdims=True)
    d_win = jnp.sum(jnp.where(mask_win, e, 0.0), axis=-1, keepdims=True)
    log_d = jnp.where(mask_move, jnp.log(d_move), jnp.log(d_win))
    out = s - log_d

    # Narrow store: only the real (move+win) columns go back to HBM.
    out_ref[...] = out[:, :head].astype(out_ref.dtype)


def prepare_mlp_params(params, *, use_bf16=False):
    """One-time padding / head fusion of the weights (outside the hot path)."""
    w1, b1, wm, bm, ww, bw = params
    in_size, hiddens = w1.shape
    move_size = wm.shape[1]
    win_size = ww.shape[1]

    hid_pad = _round_up(hiddens, 128)
    head_pad = _round_up(move_size + win_size, 128)

    w1p = jnp.zeros((in_size, hid_pad), jnp.float32).at[:, :hiddens].set(w1)
    b1p = jnp.zeros((1, hid_pad), jnp.float32).at[:, :hiddens].set(b1)

    whp = jnp.zeros((hid_pad, head_pad), jnp.float32)
    whp = whp.at[:hiddens, :move_size].set(wm)
    whp = whp.at[:hiddens, move_size:move_size + win_size].set(ww)
    bhp = jnp.zeros((1, head_pad), jnp.float32)
    bhp = bhp.at[:, :move_size].set(bm)
    bhp = bhp.at[:, move_size:move_size + win_size].set(bw)

    if use_bf16:
        w1p = w1p.astype(jnp.bfloat16)
        whp = whp.astype(jnp.bfloat16)

    return {
        "w1p": w1p, "b1p": b1p, "whp": whp, "bhp": bhp,
        "in_size": in_size, "hid_pad": hid_pad, "head_pad": head_pad,
        "move_size": move_size, "win_size": win_size,
        "use_bf16": use_bf16,
    }


def mlp_forward(x, prepared, *, block_batch=1024, precision=None):
    """Batch-gridded Pallas forward.  Returns (move_log_probs, win_log_probs), f32."""
    w1p, b1p = prepared["w1p"], prepared["b1p"]
    whp, bhp = prepared["whp"], prepared["bhp"]
    in_size = prepared["in_size"]
    hid_pad = prepared["hid_pad"]
    head_pad = prepared["head_pad"]
    move_size = prepared["move_size"]
    win_size = prepared["win_size"]
    use_bf16 = prepared["use_bf16"]
    head = move_size + win_size

    B = x.shape[0]

    # --- Batch tiling: rows per tile multiple of 8 (16 for bf16 packing). -----
    min_tile = 16 if use_bf16 else 8
    b_min = _round_up(B, min_tile)
    tb = min(block_batch, b_min)
    # v7x megacore: keep >= 2 grid steps when the batch supports it.
    if b_min >= 2 * min_tile:
        tb = min(tb, _round_up(max(b_min // 2, min_tile), min_tile))
    tb = max(min_tile, _round_up(tb, min_tile))
    b_pad = _round_up(B, tb)

    xp = x.astype(jnp.float32)   # kernel casts to bf16 in-VMEM if requested
    if b_pad != B:
        xp = jnp.zeros((b_pad, in_size), jnp.float32).at[:B].set(xp)

    grid = (b_pad // tb,)

    # --- VMEM budget: double-buffered x/out tiles + resident weights. ----------
    w_itemsize = 2 if use_bf16 else 4
    tile_bytes = 2 * (tb * in_size * 4) + 2 * (tb * head * 4)
    weight_bytes = (w1p.size + whp.size) * w_itemsize + (b1p.size + bhp.size) * 4
    vmem_bytes = int(min(max(2 * (tile_bytes + weight_bytes), 4 << 20), 48 << 20))

    cost = pl.CostEstimate(
        flops=2 * b_pad * (in_size * hid_pad + hid_pad * head_pad),
        transcendentals=b_pad * (head_pad + 2),
        bytes_accessed=(xp.size * 4 + weight_bytes + b_pad * head * 4),
    )

    kernel = functools.partial(
        mlp_kernel, move_size=move_size, win_size=win_size,
        use_bf16=use_bf16, precision=precision)

    out = pl.pallas_call(
        kernel,
        out_shape=jax.ShapeDtypeStruct((b_pad, head), jnp.float32),
        grid=grid,
        in_specs=[
            pl.BlockSpec((tb, in_size), lambda i: (i, 0)),        # x tile
            pl.BlockSpec((in_size, hid_pad), lambda i: (0, 0)),   # w1 (resident)
            pl.BlockSpec((1, hid_pad), lambda i: (0, 0)),         # b1 (resident)
            pl.BlockSpec((hid_pad, head_pad), lambda i: (0, 0)),  # fused head W
            pl.BlockSpec((1, head_pad), lambda i: (0, 0)),        # fused head b
        ],
        out_specs=pl.BlockSpec((tb, head), lambda i: (i, 0)),     # narrow output
        compiler_params=pltpu.CompilerParams(
            dimension_semantics=("parallel",),
            vmem_limit_bytes=vmem_bytes,
        ),
        cost_estimate=cost,
    )(xp, w1p, b1p, whp, bhp)

    move_logp = out[:B, :move_size]
    win_logp = out[:B, move_size:head]
    return move_logp, win_logp


def init_params(key, in_size, hiddens, move_size, win_size):
    # Deterministic init mimicking nn.Linear's uniform(-1/sqrt(fan_in), 1/sqrt(fan_in)).
    k1, k2, k3, k4, k5, k6 = jax.random.split(key, 6)

    def lin(kw, kb, fan_in, fan_out):
        bound = 1.0 / jnp.sqrt(fan_in)
        w = jax.random.uniform(kw, (fan_in, fan_out), jnp.float32, -bound, bound)
        b = jax.random.uniform(kb, (1, fan_out), jnp.float32, -bound, bound)
        return w, b

    w1, b1 = lin(k1, k2, in_size, hiddens)
    wm, bm = lin(k3, k4, hiddens, move_size)
    ww, bw = lin(k5, k6, hiddens, win_size)
    return (w1, b1, wm, bm, ww, bw)


if __name__ == "__main__":
    # Small shapes consistent with the module: batch=2, inSize=16, hiddens=32,
    # moveSize=8, winSize=4.
    B, in_size, hiddens, move_size, win_size = 2, 16, 32, 8, 4

    key = jax.random.PRNGKey(0)
    kx, kp = jax.random.split(key)
    x = jax.random.normal(kx, (B, in_size), jnp.float32)
    params = init_params(kp, in_size, hiddens, move_size, win_size)

    prepared = prepare_mlp_params(params)           # one-time padding / fusion
    move_logp, win_logp = mlp_forward(x, prepared)
    jax.block_until_ready((move_logp, win_logp))

    # Pure-JAX reference check.
    w1, b1, wm, bm, ww, bw = params
    h = jnp.maximum(x @ w1 + b1, 0.0)
    ref_move = jax.nn.log_softmax(h @ wm + bm, axis=-1)
    ref_win = jax.nn.log_softmax(h @ ww + bw, axis=-1)
    assert move_logp.shape == (B, move_size) and win_logp.shape == (B, win_size)
    assert jnp.allclose(move_logp, ref_move, atol=1e-5)
    assert jnp.allclose(win_logp, ref_win, atol=1e-5)

    print("KERNEL_OK")
</pallas_src>

<mosaic_0001>
module attributes {stable_mosaic.version = 11 : i64} {
  func.func @mlp_kernel(%arg0: i32, %arg1: memref<8x16xf32, #tpu.memory_space<vmem>>, %arg2: memref<16x128xf32, #tpu.memory_space<vmem>>, %arg3: memref<1x128xf32, #tpu.memory_space<vmem>>, %arg4: memref<128x128xf32, #tpu.memory_space<vmem>>, %arg5: memref<1x128xf32, #tpu.memory_space<vmem>>, %arg6: memref<8x12xf32, #tpu.memory_space<vmem>>) attributes {dimension_semantics = [#tpu.dimension_semantics<parallel>], iteration_bounds = array<i64: 1>, scalar_prefetch = 0 : i64, scratch_operands = 0 : i64, tpu.core_type = #tpu.core_type<tc>, window_params = [{transform_indices = @transform_0, window_bounds = array<i64: 8, 16>}, {pipeline_mode = #tpu.pipeline_mode<synchronous>, transform_indices = @transform_1, window_bounds = array<i64: 16, 128>}, {pipeline_mode = #tpu.pipeline_mode<synchronous>, transform_indices = @transform_2, window_bounds = array<i64: 1, 128>}, {pipeline_mode = #tpu.pipeline_mode<synchronous>, transform_indices = @transform_3, window_bounds = array<i64: 128, 128>}, {pipeline_mode = #tpu.pipeline_mode<synchronous>, transform_indices = @transform_4, window_bounds = array<i64: 1, 128>}, {transform_indices = @transform_5, window_bounds = array<i64: 8, 12>}]} {
    %c0 = arith.constant 0 : index
    %c0_0 = arith.constant 0 : index
    %0 = vector.load %arg1[%c0, %c0_0] : memref<8x16xf32, #tpu.memory_space<vmem>>, vector<8x16xf32>
    %c0_1 = arith.constant 0 : index
    %c0_2 = arith.constant 0 : index
    %1 = vector.load %arg2[%c0_1, %c0_2] : memref<16x128xf32, #tpu.memory_space<vmem>>, vector<16x128xf32>
    %cst = arith.constant dense<0.000000e+00> : vector<8x128xf32>
    %2 = tpu.matmul %0, %1, %cst {dimension_numbers = #tpu.dot_dimension_numbers<[1], [0], [0], [1], [0, 0, 1, 1], [], []>} : vector<8x16xf32>, vector<16x128xf32>, vector<8x128xf32> -> vector<8x128xf32>
    %c0_3 = arith.constant 0 : index
    %c0_4 = arith.constant 0 : index
    %3 = vector.load %arg3[%c0_3, %c0_4] : memref<1x128xf32, #tpu.memory_space<vmem>>, vector<1x128xf32>
    %4 = vector.broadcast %3 : vector<1x128xf32> to vector<8x128xf32>
    %5 = arith.addf %2, %4 : vector<8x128xf32>
    %cst_5 = arith.constant 0.000000e+00 : f32
    %6 = vector.broadcast %cst_5 : f32 to vector<8x128xf32>
    %7 = arith.maximumf %5, %6 : vector<8x128xf32>
    %c0_6 = arith.constant 0 : index
    %c0_7 = arith.constant 0 : index
    %8 = vector.load %arg4[%c0_6, %c0_7] : memref<128x128xf32, #tpu.memory_space<vmem>>, vector<128x128xf32>
    %cst_8 = arith.constant dense<0.000000e+00> : vector<8x128xf32>
    %9 = tpu.matmul %7, %8, %cst_8 {dimension_numbers = #tpu.dot_dimension_numbers<[1], [0], [0], [1], [0, 0, 1, 1], [], []>} : vector<8x128xf32>, vector<128x128xf32>, vector<8x128xf32> -> vector<8x128xf32>
    %c0_9 = arith.constant 0 : index
    %c0_10 = arith.constant 0 : index
    %10 = vector.load %arg5[%c0_9, %c0_10] : memref<1x128xf32, #tpu.memory_space<vmem>>, vector<1x128xf32>
    %11 = vector.broadcast %10 : vector<1x128xf32> to vector<8x128xf32>
    %12 = arith.addf %9, %11 : vector<8x128xf32>
    %13 = tpu.iota {dimensions = array<i32: 1>} : vector<8x128xi32>
    %c8_i32 = arith.constant 8 : i32
    %14 = vector.broadcast %c8_i32 : i32 to vector<8x128xi32>
    %15 = arith.cmpi slt, %13, %14 : vector<8x128xi32>
    %c8_i32_11 = arith.constant 8 : i32
    %16 = vector.broadcast %c8_i32_11 : i32 to vector<8x128xi32>
    %17 = arith.cmpi sge, %13, %16 : vector<8x128xi32>
    %c12_i32 = arith.constant 12 : i32
    %18 = vector.broadcast %c12_i32 : i32 to vector<8x128xi32>
    %19 = arith.cmpi slt, %13, %18 : vector<8x128xi32>
    %20 = arith.andi %17, %19 : vector<8x128xi1>
    %cst_12 = arith.constant -1.000000e+30 : f32
    %21 = vector.broadcast %cst_12 : f32 to vector<8x128xf32>
    %22 = arith.select %15, %12, %21 : vector<8x128xi1>, vector<8x128xf32>
    %cst_13 = arith.constant dense<0xFF800000> : vector<8xf32>
    %23 = vector.multi_reduction <maximumf>, %22, %cst_13 [1] : vector<8x128xf32> to vector<8xf32>
    %24 = vector.shape_cast %23 : vector<8xf32> to vector<8x1xf32>
    %cst_14 = arith.constant -1.000000e+30 : f32
    %25 = vector.broadcast %cst_14 : f32 to vector<8x128xf32>
    %26 = arith.select %20, %12, %25 : vector<8x128xi1>, vector<8x128xf32>
    %cst_15 = arith.constant dense<0xFF800000> : vector<8xf32>
    %27 = vector.multi_reduction <maximumf>, %26, %cst_15 [1] : vector<8x128xf32> to vector<8xf32>
    %28 = vector.shape_cast %27 : vector<8xf32> to vector<8x1xf32>
    %29 = vector.shape_cast %24 : vector<8x1xf32> to vector<8x1xf32>
    %30 = vector.broadcast %29 : vector<8x1xf32> to vector<8x128xf32>
    %31 = vector.shape_cast %28 : vector<8x1xf32> to vector<8x1xf32>
    %32 = vector.broadcast %31 : vector<8x1xf32> to vector<8x128xf32>
    %33 = arith.select %15, %30, %32 : vector<8x128xi1>, vector<8x128xf32>
    %34 = arith.subf %12, %33 : vector<8x128xf32>
    %35 = math.exp %34 : vector<8x128xf32>
    %cst_16 = arith.constant 0.000000e+00 : f32
    %36 = vector.broadcast %cst_16 : f32 to vector<8x128xf32>
    %37 = arith.select %15, %35, %36 : vector<8x128xi1>, vector<8x128xf32>
    %cst_17 = arith.constant dense<0.000000e+00> : vector<8xf32>
    %38 = vector.multi_reduction <add>, %37, %cst_17 [1] : vector<8x128xf32> to vector<8xf32>
    %39 = vector.shape_cast %38 : vector<8xf32> to vector<8x1xf32>
    %cst_18 = arith.constant 0.000000e+00 : f32
    %40 = vector.broadcast %cst_18 : f32 to vector<8x128xf32>
    %41 = arith.select %20, %35, %40 : vector<8x128xi1>, vector<8x128xf32>
    %cst_19 = arith.constant dense<0.000000e+00> : vector<8xf32>
    %42 = vector.multi_reduction <add>, %41, %cst_19 [1] : vector<8x128xf32> to vector<8xf32>
    %43 = vector.shape_cast %42 : vector<8xf32> to vector<8x1xf32>
    %44 = math.log %39 : vector<8x1xf32>
    %45 = math.log %43 : vector<8x1xf32>
    %46 = vector.shape_cast %44 : vector<8x1xf32> to vector<8x1xf32>
    %47 = vector.broadcast %46 : vector<8x1xf32> to vector<8x128xf32>
    %48 = vector.shape_cast %45 : vector<8x1xf32> to vector<8x1xf32>
    %49 = vector.broadcast %48 : vector<8x1xf32> to vector<8x128xf32>
    %50 = arith.select %15, %47, %49 : vector<8x128xi1>, vector<8x128xf32>
    %51 = arith.subf %34, %50 : vector<8x128xf32>
    %52 = vector.extract_strided_slice %51 {offsets = [0, 0], sizes = [8, 12], strides = [1, 1]} : vector<8x128xf32> to vector<8x12xf32>
    %c0_20 = arith.constant 0 : index
    %c0_21 = arith.constant 0 : index
    %53 = vector.load %arg6[%c0_20, %c0_21] : memref<8x12xf32, #tpu.memory_space<vmem>>, vector<8x12xf32>
    tpu.vector_store %arg6[%c0_20, %c0_21], %52 {strides = array<i32>} : memref<8x12xf32, #tpu.memory_space<vmem>>, vector<8x12xf32>,
    return
  }
  func.func @transform_0(%arg0: i32) -> (i32, i32) {
    %c0_i32 = arith.constant 0 : i32
    %c0_i32_0 = arith.constant 0 : i32
    return %arg0, %c0_i32 : i32, i32
  }
  func.func @transform_1(%arg0: i32) -> (i32, i32) {
    %c0_i32 = arith.constant 0 : i32
    %c0_i32_0 = arith.constant 0 : i32
    %c0_i32_1 = arith.constant 0 : i32
    return %c0_i32, %c0_i32_0 : i32, i32
  }
  func.func @transform_2(%arg0: i32) -> (i32, i32) {
    %c0_i32 = arith.constant 0 : i32
    %c0_i32_0 = arith.constant 0 : i32
    %c0_i32_1 = arith.constant 0 : i32
    return %c0_i32, %c0_i32_0 : i32, i32
  }
  func.func @transform_3(%arg0: i32) -> (i32, i32) {
    %c0_i32 = arith.constant 0 : i32
    %c0_i32_0 = arith.constant 0 : i32
    %c0_i32_1 = arith.constant 0 : i32
    return %c0_i32, %c0_i32_0 : i32, i32
  }
  func.func @transform_4(%arg0: i32) -> (i32, i32) {
    %c0_i32 = arith.constant 0 : i32
    %c0_i32_0 = arith.constant 0 : i32
    %c0_i32_1 = arith.constant 0 : i32
    return %c0_i32, %c0_i32_0 : i32, i32
  }
  func.func @transform_5(%arg0: i32) -> (i32, i32) {
    %c0_i32 = arith.constant 0 : i32
    %c0_i32_0 = arith.constant 0 : i32
    return %arg0, %c0_i32 : i32, i32
  }
}

</mosaic_0001>

<llo_original>
// kernel: tpu_custom_call.1
$region0: #{tpu_custom_call.1}
  #allocation0 [shape = 'u32[]', space=smem, size = 0x4, offset = 0x4, fixed_abs, tag = 'smem constant byte address 0x4 - core index']
  #allocation1 [shape = 'u32[144,128]{1,0:T(1,128)}', space=vmem, size = 0x12000, scoped, tag = 'internal scratch']
  %s0 = inlined_call_operand.hbm [shape: f32[8,16], index: 0, kind: input, shape index: {}]
  %s1 = inlined_call_operand.hbm [shape: f32[16,128], index: 1, kind: input, shape index: {}]
  %s2 = inlined_call_operand.vmem [shape: f32[1,128], index: 2, kind: input, shape index: {}]
  %s3 = inlined_call_operand.hbm [shape: f32[128,128], index: 3, kind: input, shape index: {}]
  %s4 = inlined_call_operand.vmem [shape: f32[1,128], index: 4, kind: input, shape index: {}]
  %s5 = inlined_call_operand.hbm [shape: f32[8,12], index: 5, kind: output, shape index: {}]
  %s6 = sld [smem:[#allocation0]]
  $region42: #{tpu_custom_call.1} parent=0
    _
  %s8 = ssub.s32 1, %s6
  %s9 = scalar_select 0, %s8, %s6
  $region1: #{tpu_custom_call.1} parent=0
    #allocation2 [shape = 'u8[4096]{0}', space=vmem, size = 0x1000, scoped, tag = 'input window, operand 0, single buffered']
    #allocation3 [shape = 's32[1]{0}', space=sflag, size = 0x4, scoped, tag = 'scoped memory for tpu_custom_call.1']
    #allocation4 [shape = 's32[1]{0}', space=sflag, size = 0x4, scoped, tag = 'scoped memory for tpu_custom_call.1']
    #allocation5 [shape = 'u8[8192]{0}', space=vmem, size = 0x2000, scoped, tag = 'input window, operand 1, single buffered']
    #allocation6 [shape = 's32[1]{0}', space=sflag, size = 0x4, scoped, tag = 'scoped memory for tpu_custom_call.1']
    #allocation7 [shape = 'u8[65536]{0}', space=vmem, size = 0x10000, scoped, tag = 'input window, operand 3, single buffered']
    #allocation8 [shape = 'u8[4096]{0}', space=vmem, size = 0x1000, scoped, tag = 'output window, operand 0, single buffered']
    %10 = vsyncpa [#allocation3], 0
    %11 = vsyncpa [#allocation6], 0
    %12 = vsyncpa [#allocation4], 0
    // Predicated region
    $region2: #{tpu_custom_call.1} parent=1 // pred_check
      _
    $region3: #{tpu_custom_call.1} parent=1 // pred_check_branch
      %14 = sbr.rel (0) target = $region5
    $region4: #{tpu_custom_call.1} parent=1 // pred_region
      %s16 = ssub.s32 128, 128
      %17 = vsyncadd [#allocation3], %s16
      %s19 = sshll.u32 [#allocation2], 4
      %s20 = int_to_ptr.vmem [resolvable:$true] %s19
      %22 = dma.hbm_to_vmem [thread:$0]  %s0, 128, %s20, [#allocation3]
    $region5: #{tpu_custom_call.1} parent=1 // pred_fallthru
      _
    // Predicated region
    $region6: #{tpu_custom_call.1} parent=1 // pred_check
      _
    $region7: #{tpu_custom_call.1} parent=1 // pred_check_branch
      %24 = sbr.rel (0) target = $region9
    $region8: #{tpu_custom_call.1} parent=1 // pred_region
      %s26 = ssub.s32 256, 256
      %27 = vsyncadd [#allocation6], %s26
      %s28 = sshll.u32 [#allocation5], 4
      %s29 = int_to_ptr.vmem [resolvable:$true] %s28
      %34 = dma.hbm_to_vmem [thread:$0]  %s1, 256, %s29, [#allocation6], 128, 128, 8
    $region9: #{tpu_custom_call.1} parent=1 // pred_fallthru
      _
    // Predicated region
    $region10: #{tpu_custom_call.1} parent=1 // pred_check
      _
    $region11: #{tpu_custom_call.1} parent=1 // pred_check_branch
      %36 = sbr.rel (0) target = $region13
    $region12: #{tpu_custom_call.1} parent=1 // pred_region
      _
    $region13: #{tpu_custom_call.1} parent=1 // pred_fallthru
      _
    // Predicated region
    $region14: #{tpu_custom_call.1} parent=1 // pred_check
      _
    $region15: #{tpu_custom_call.1} parent=1 // pred_check_branch
      %38 = sbr.rel (0) target = $region17
    $region16: #{tpu_custom_call.1} parent=1 // pred_region
      %s40 = ssub.s32 2048, 2048
      %41 = vsyncadd [#allocation6], %s40
      %s42 = sshll.u32 [#allocation7], 4
      %s43 = int_to_ptr.vmem [resolvable:$true] %s42
      %48 = dma.hbm_to_vmem [thread:$0]  %s3, 2048, %s43, [#allocation6], 128, 128, 8
    $region17: #{tpu_custom_call.1} parent=1 // pred_fallthru
      _
    // Predicated region
    $region18: #{tpu_custom_call.1} parent=1 // pred_check
      _
    $region19: #{tpu_custom_call.1} parent=1 // pred_check_branch
      %50 = sbr.rel (0) target = $region21
    $region20: #{tpu_custom_call.1} parent=1 // pred_region
      _
    $region21: #{tpu_custom_call.1} parent=1 // pred_fallthru
      _
    // Predicated region
    $region22: #{tpu_custom_call.1} parent=1 // pred_check
      _
    $region23: #{tpu_custom_call.1} parent=1 // pred_check_branch
      %52 = sbr.rel (0) target = $region25
    $region24: #{tpu_custom_call.1} parent=1 // pred_region
      %53 = dma.done [#allocation3], 128
    $region25: #{tpu_custom_call.1} parent=1 // pred_fallthru
      _
    // Predicated region
    $region26: #{tpu_custom_call.1} parent=1 // pred_check
      _
    $region27: #{tpu_custom_call.1} parent=1 // pred_check_branch
      %55 = sbr.rel (0) target = $region29
    $region28: #{tpu_custom_call.1} parent=1 // pred_region
      %56 = dma.done [#allocation6], 256
    $region29: #{tpu_custom_call.1} parent=1 // pred_fallthru
      _
    // Predicated region
    $region30: #{tpu_custom_call.1} parent=1 // pred_check
      _
    $region31: #{tpu_custom_call.1} parent=1 // pred_check_branch
      %58 = sbr.rel (0) target = $region33
    $region32: #{tpu_custom_call.1} parent=1 // pred_region
      %59 = dma.done [#allocation6], 2048
    $region33: #{tpu_custom_call.1} parent=1 // pred_fallthru
      _
    %v60 = vld [vmem:[#allocation2] sm:$0xff]
    %v61 = vld [vmem:[#allocation5] sm:$0xff]
    %v62 = vld [vmem:[#allocation5 + $0x8] sm:$0xff]
    %v63 = vld [vmem:[%s2] sm:$0x1]
    %v65 = vlaneseq
    %v66 = vshrl.u32 %v65, 7
    %v67 = vsub.s32 0, %v66
    %v68 = vrot.slane %v63, %v67
    %vm70 = vcmask 130048
    %v72 = vsel %vm70, %v60, 0
    %74 = vmatprep.subr.mxu0 0.0
    %75 = vmatpush1.msra.mxu0 %v61
    %76 = vmatprep.subr.mxu0 0.0
    %77 = vmatpush1.msra.mxu0 %v62
    %78 = vmatprep.subr.mxu0 0.0
    %79 = vmatpush1.msra.mxu0 0.0
    %80 = vmatprep.subr.mxu0 0.0
    %81 = vmatpush1.msra.mxu0 0.0
    %82 = vmatprep.subr.mxu0 0.0
    %83 = vmatpush1.msra.mxu0 0.0
    %84 = vmatprep.subr.mxu0 0.0
    %85 = vmatpush1.msra.mxu0 0.0
    %86 = vmatprep.subr.mxu0 0.0
    %87 = vmatpush1.msra.mxu0 0.0
    %88 = vmatprep.subr.mxu0 0.0
    %89 = vmatpush1.msra.mxu0 0.0
    %90 = vmatprep.subr.mxu0 0.0
    %91 = vmatpush1.msra.mxu0 0.0
    %92 = vmatprep.subr.mxu0 0.0
    %93 = vmatpush1.msra.mxu0 0.0
    %94 = vmatprep.subr.mxu0 0.0
    %95 = vmatpush1.msra.mxu0 0.0
    %96 = vmatprep.subr.mxu0 0.0
    %97 = vmatpush1.msra.mxu0 0.0
    %98 = vmatprep.subr.mxu0 0.0
    %99 = vmatpush1.msra.mxu0 0.0
    %100 = vmatprep.subr.mxu0 0.0
    %101 = vmatpush1.msra.mxu0 0.0
    %102 = vmatprep.subr.mxu0 0.0
    %103 = vmatpush1.msra.mxu0 0.0
    %104 = vmatprep.subr.mxu0 0.0
    %105 = vmatpush1.msra.mxu0 0.0
    %106 = vmatprep.subr.mxu0 0.0
    %107 = vmatpush1.msra.mxu0 0.0
    %108 = vmatprep.subr.mxu0 0.0
    %109 = vmatpush1.msra.mxu0 0.0
    %110 = vmatprep.subr.mxu0 0.0
    %111 = vmatpush1.msra.mxu0 0.0
    %112 = vmatprep.subr.mxu0 0.0
    %113 = vmatpush1.msra.mxu0 0.0
    %114 = vmatprep.subr.mxu0 0.0
    %115 = vmatpush1.msra.mxu0 0.0
    %116 = vmatprep.subr.mxu0 0.0
    %117 = vmatpush1.msra.mxu0 0.0
    %118 = vmatprep.subr.mxu0 0.0
    %119 = vmatpush1.msra.mxu0 0.0
    %120 = vmatprep.subr.mxu0 0.0
    %121 = vmatpush1.msra.mxu0 0.0
    %122 = vmatprep.subr.mxu0 0.0
    %123 = vmatpush1.msra.mxu0 0.0
    %124 = vmatprep.subr.mxu0 0.0
    %125 = vmatpush1.msra.mxu0 0.0
    %126 = vmatprep.subr.mxu0 0.0
    %127 = vmatpush1.msra.mxu0 0.0
    %128 = vmatprep.subr.mxu0 0.0
    %129 = vmatpush1.msra.mxu0 0.0
    %130 = vmatprep.subr.mxu0 0.0
    %131 = vmatpush1.msra.mxu0 0.0
    %132 = vmatprep.subr.mxu0 0.0
    %133 = vmatpush1.msra.mxu0 0.0
    %134 = vmatprep.subr.mxu0 0.0
    %135 = vmatpush1.msra.mxu0 0.0
    %136 = vmatprep.subr.mxu0 0.0
    %137 = vmatpush1.msra.mxu0 0.0
    %138 = vmatprep.mubr.f32.mxu0 0.0
    %139 = vmatmul.mubr.f32.gmra.mrb[0].mxu0 %v72
    %v140 = vpop.f32.mrb[0].mxu0
    %v141 = vadd.f32 %v68, %v140
    %v142 = vpop.f32.mrb[0].mxu0
    %143 = vdwg.mxu0
    %v144 = vmax.f32 %v141, 0.0
    %v145 = vld [vmem:[#allocation7] sm:$0xff]
    %v146 = vld [vmem:[#allocation7 + $0x8] sm:$0xff]
    %v147 = vld [vmem:[#allocation7 + $0x10] sm:$0xff]
    %v148 = vld [vmem:[#allocation7 + $0x18] sm:$0xff]
    %v149 = vld [vmem:[#allocation7 + $0x20] sm:$0xff]
    %v150 = vld [vmem:[#allocation7 + $0x28] sm:$0xff]
    %v151 = vld [vmem:[#allocation7 + $0x30] sm:$0xff]
    %v152 = vld [vmem:[#allocation7 + $0x38] sm:$0xff]
    %v153 = vld [vmem:[#allocation7 + $0x40] sm:$0xff]
    %v154 = vld [vmem:[#allocation7 + $0x48] sm:$0xff]
    %v155 = vld [vmem:[#allocation7 + $0x50] sm:$0xff]
    %v156 = vld [vmem:[#allocation7 + $0x58] sm:$0xff]
    %v157 = vld [vmem:[#allocation7 + $0x60] sm:$0xff]
    %v158 = vld [vmem:[#allocation7 + $0x68] sm:$0xff]
    %v159 = vld [vmem:[#allocation7 + $0x70] sm:$0xff]
    %v160 = vld [vmem:[#allocation7 + $0x78] sm:$0xff]
    %v161 = vld [vmem:[%s4] sm:$0x1]
    %v163 = vlaneseq
    %v164 = vshrl.u32 %v163, 7
    %v165 = vsub.s32 0, %v164
    %v166 = vrot.slane %v161, %v165
    %168 = vmatprep.subr.mxu0 0.0
    %169 = vmatpush1.msra.mxu0 %v145
    %170 = vmatprep.subr.mxu0 0.0
    %171 = vmatpush1.msra.mxu0 %v146
    %172 = vmatprep.subr.mxu0 0.0
    %173 = vmatpush1.msra.mxu0 %v147
    %174 = vmatprep.subr.mxu0 0.0
    %175 = vmatpush1.msra.mxu0 %v148
    %176 = vmatprep.subr.mxu0 0.0
    %177 = vmatpush1.msra.mxu0 %v149
    %178 = vmatprep.subr.mxu0 0.0
    %179 = vmatpush1.msra.mxu0 %v150
    %180 = vmatprep.subr.mxu0 0.0
    %181 = vmatpush1.msra.mxu0 %v151
    %182 = vmatprep.subr.mxu0 0.0
    %183 = vmatpush1.msra.mxu0 %v152
    %184 = vmatprep.subr.mxu0 0.0
    %185 = vmatpush1.msra.mxu0 %v153
    %186 = vmatprep.subr.mxu0 0.0
    %187 = vmatpush1.msra.mxu0 %v154
    %188 = vmatprep.subr.mxu0 0.0
    %189 = vmatpush1.msra.mxu0 %v155
    %190 = vmatprep.subr.mxu0 0.0
    %191 = vmatpush1.msra.mxu0 %v156
    %192 = vmatprep.subr.mxu0 0.0
    %193 = vmatpush1.msra.mxu0 %v157
    %194 = vmatprep.subr.mxu0 0.0
    %195 = vmatpush1.msra.mxu0 %v158
    %196 = vmatprep.subr.mxu0 0.0
    %197 = vmatpush1.msra.mxu0 %v159
    %198 = vmatprep.subr.mxu0 0.0
    %199 = vmatpush1.msra.mxu0 %v160
    %200 = vmatprep.subr.mxu0 0.0
    %201 = vmatpush1.msra.mxu0 0.0
    %202 = vmatprep.subr.mxu0 0.0
    %203 = vmatpush1.msra.mxu0 0.0
    %204 = vmatprep.subr.mxu0 0.0
    %205 = vmatpush1.msra.mxu0 0.0
    %206 = vmatprep.subr.mxu0 0.0
    %207 = vmatpush1.msra.mxu0 0.0
    %208 = vmatprep.subr.mxu0 0.0
    %209 = vmatpush1.msra.mxu0 0.0
    %210 = vmatprep.subr.mxu0 0.0
    %211 = vmatpush1.msra.mxu0 0.0
    %212 = vmatprep.subr.mxu0 0.0
    %213 = vmatpush1.msra.mxu0 0.0
    %214 = vmatprep.subr.mxu0 0.0
    %215 = vmatpush1.msra.mxu0 0.0
    %216 = vmatprep.subr.mxu0 0.0
    %217 = vmatpush1.msra.mxu0 0.0
    %218 = vmatprep.subr.mxu0 0.0
    %219 = vmatpush1.msra.mxu0 0.0
    %220 = vmatprep.subr.mxu0 0.0
    %221 = vmatpush1.msra.mxu0 0.0
    %222 = vmatprep.subr.mxu0 0.0
    %223 = vmatpush1.msra.mxu0 0.0
    %224 = vmatprep.subr.mxu0 0.0
    %225 = vmatpush1.msra.mxu0 0.0
    %226 = vmatprep.subr.mxu0 0.0
    %227 = vmatpush1.msra.mxu0 0.0
    %228 = vmatprep.subr.mxu0 0.0
    %229 = vmatpush1.msra.mxu0 0.0
    %230 = vmatprep.subr.mxu0 0.0
    %231 = vmatpush1.msra.mxu0 0.0
    %232 = vmatprep.mubr.f32.mxu0 0.0
    %233 = vmatmul.mubr.f32.gmra.mrb[0].mxu0 %v144
    %v234 = vpop.f32.mrb[0].mxu0
    %v235 = vadd.f32 %v166, %v234
    %v236 = vpop.f32.mrb[0].mxu0
    %237 = vdwg.mxu0
    %v238 = vlaneseq
    %v239 = vand.u32 %v238, 127
    %vm240 = vcmp.lt.s32.totalorder %v239, 8
    %vm241 = vcmp.ge.s32.totalorder %v239, 8
    %vm242 = vcmp.lt.s32.totalorder %v239, 12
    %vm243 = vmand %vm241, %vm242
    %v244 = vsel %vm240, %v235, -1e+30
    %245 = vmax.xlane.f32.xlu0 %v244
    %v246 = vpop.xlane.xlu0 %245
    %v247 = vsel %vm243, %v235, -1e+30
    %248 = vmax.xlane.f32.xlu0 %v247
    %v249 = vpop.xlane.xlu0 %248
    %v250 = vsel %vm240, %v246, %v249
    %v251 = vsub.f32 %v235, %v250
    %v252 = vmul.f32 %v251, 1.442695
    %v253 = vpow.pop %v252
    %v254 = vsel %vm240, %v253, 0.0
    %255 = vadd.xlane.f32.xlu0 %v254
    %v256 = vpop.xlane.xlu0 %255
    %v257 = vsel %vm243, %v253, 0.0
    %258 = vadd.xlane.f32.xlu0 %v257
    %v259 = vpop.xlane.xlu0 %258
    %v260 = vlog2.pop %v256
    %v261 = vmul.f32 %v260, 0.6931472
    %v262 = vlog2.pop %v259
    %v263 = vmul.f32 %v262, 0.6931472
    %v264 = vsel %vm240, %v261, %v263
    %v265 = vsub.f32 %v251, %v264
    %vm266 = vcmask 97280
    %267 = vst.msk [vmem:[#allocation8] sm:$0xff] %vm266, %v265
    // Predicated region
    $region34: #{tpu_custom_call.1} parent=1 // pred_check
      _
    $region35: #{tpu_custom_call.1} parent=1 // pred_check_branch
      %269 = sbr.rel (0) target = $region37
    $region36: #{tpu_custom_call.1} parent=1 // pred_region
      %s271 = ssub.s32 128, 128
      %272 = vsyncadd [#allocation4], %s271
      %s274 = sshll.u32 [#allocation8], 4
      %s275 = int_to_ptr.vmem [resolvable:$true] %s274
      %277 = dma.vmem_to_hbm [thread:$0]  %s275, 128, %s5, [#allocation4]
    $region37: #{tpu_custom_call.1} parent=1 // pred_fallthru
      _
    // Predicated region
    $region38: #{tpu_custom_call.1} parent=1 // pred_check
      _
    $region39: #{tpu_custom_call.1} parent=1 // pred_check_branch
      %279 = sbr.rel (0) target = $region41
    $region40: #{tpu_custom_call.1} parent=1 // pred_region
      %280 = dma.done [#allocation4], 128
    $region41: #{tpu_custom_call.1} parent=1 // pred_fallthru
      _
    %281 = vsyncpa [#allocation3], 1
    %282 = vsyncpa [#allocation6], 1
    %283 = vsyncpa [#allocation4], 1

</llo_original>
